<compile_context>
chip_gen: v7x
topology: tpu7x:2x2x1
jax: 0.10.0
libtpu: 0.0.40
codegen_flags: <defaults>
</compile_context>

<pallas_src>
import functools

import jax
import jax.numpy as jnp
from jax import lax
from jax.experimental import pallas as pl
from jax.experimental.pallas import tpu as pltpu

_LANE = 128


def _pcc_kernel(stride, window_length, num_windows, wb, scale_operand,
                x_ref, o_ref):
    # x_ref: (1, T, Fp)      -- full time slab for batch b, resident in VMEM
    # o_ref: (1, wb, Fp, Fp) -- wb consecutive window Gram matrices
    wblk = pl.program_id(1)
    inv_w = jnp.float32(1.0 / window_length)

    def body(j, carry):
        w = wblk * wb + j

        # Skip the padded tail of the last window-block (no wasted MXU passes;
        # the out-of-bounds part of the output block is masked on writeback).
        @pl.when(w < num_windows)
        def _():
            start = w * stride
            if stride % 8 == 0:
                start = pl.multiple_of(start, 8)  # aligned sublane loads
            x = x_ref[0, pl.ds(start, window_length), :]  # (W, Fp)

            # Contract the time axis directly (no explicit x.T).  If Mosaic
            # ever materializes a per-window relayout here, check with
            # pl.lower_as_mlir and transpose once per block instead.
            if scale_operand:
                lhs = x * inv_w  # fold 1/W into the smaller (W, Fp) operand
                gram = lax.dot_general(
                    lhs, x,
                    dimension_numbers=(((0,), (0,)), ((), ())),
                    preferred_element_type=jnp.float32)
            else:
                gram = lax.dot_general(
                    x, x,
                    dimension_numbers=(((0,), (0,)), ((), ())),
                    preferred_element_type=jnp.float32)
                gram = gram * inv_w

            o_ref[0, j, :, :] = gram

        return carry

    lax.fori_loop(0, wb, body, 0, unroll=True)


def sliding_window_pcc(x, window_length, stride, *, windows_per_block=None):
    """x: (B, T, F) float32 -> (B, num_windows, F, F) float32."""
    B, T, F = x.shape
    num_windows = (T - window_length) // stride + 1
    assert num_windows >= 1, "window_length larger than sequence"

    # Pad features up to a lane multiple: full MXU tiles, unmasked lane-dense
    # stores.  Padded columns are zero, so the top-left (F, F) block is exact.
    Fp = ((F + _LANE - 1) // _LANE) * _LANE
    x_p = jnp.pad(x, ((0, 0), (0, 0), (0, Fp - F))) if Fp != F else x

    # Per-generation VMEM budget (v7x: 64 MiB per TensorCore).
    try:
        vmem_cap = int(pltpu.get_tpu_info().vmem_capacity_bytes)
    except Exception:
        vmem_cap = 64 << 20  # most conservative (v7x)
    vmem_budget = max(vmem_cap - (8 << 20), 8 << 20)

    gram_bytes = Fp * Fp * 4
    slab_bytes = T * Fp * 4

    # Window-block size: target ~2 MiB output block (amortizes per-step
    # overhead, roofline-sized writeback DMA).
    if windows_per_block is None:
        wb = max(1, (2 << 20) // gram_bytes)
        wb = min(wb, num_windows)
        if B == 1 and num_windows >= 2:
            # v7x has 2 TCs: make sure at least 2 blocks exist on a parallel axis.
            wb = min(wb, pl.cdiv(num_windows, 2))
    else:
        wb = max(1, min(int(windows_per_block), num_windows))

    # Fit the VMEM budget: shrink wb first, then single-buffer the input slab.
    in_bufs = 2

    def vmem_needed(wb_, in_bufs_):
        return in_bufs_ * slab_bytes + 2 * wb_ * gram_bytes + (1 << 20)

    while wb > 1 and vmem_needed(wb, in_bufs) > vmem_budget:
        wb = max(1, wb // 2)
    if vmem_needed(wb, in_bufs) > vmem_budget:
        in_bufs = 1  # keep only one copy of the (T, Fp) slab resident

    num_wblocks = pl.cdiv(num_windows, wb)
    scale_operand = window_length <= Fp

    kernel = functools.partial(
        _pcc_kernel, stride, window_length, num_windows, wb, scale_operand)

    in_spec_kwargs = {}
    if in_bufs == 1:
        in_spec_kwargs["pipeline_mode"] = pl.Buffered(1)
    in_spec = pl.BlockSpec((1, T, Fp), lambda b, w: (b, 0, 0), **in_spec_kwargs)

    needed = vmem_needed(wb, in_bufs)
    compiler_kwargs = dict(dimension_semantics=("parallel", "parallel"))
    if needed > (16 << 20):
        compiler_kwargs["vmem_limit_bytes"] = int(min(needed, vmem_budget))

    cost = pl.CostEstimate(
        flops=2 * B * num_windows * window_length * Fp * Fp,
        transcendentals=0,
        bytes_accessed=B * T * Fp * 4 + B * num_windows * Fp * Fp * 4)

    out = pl.pallas_call(
        kernel,
        out_shape=jax.ShapeDtypeStruct((B, num_windows, Fp, Fp), jnp.float32),
        grid_spec=pltpu.PrefetchScalarGridSpec(
            num_scalar_prefetch=0,
            grid=(B, num_wblocks),
            in_specs=[in_spec],
            out_specs=pl.BlockSpec((1, wb, Fp, Fp), lambda b, w: (b, w, 0, 0)),
        ),
        compiler_params=pltpu.CompilerParams(**compiler_kwargs),
        cost_estimate=cost,
    )(x_p)

    if Fp != F:
        out = out[:, :, :F, :F]
    return out


def sliding_window_pcc_ref(x, window_length, stride):
    """Pure-JAX reference mirroring the PyTorch loop."""
    B, T, F = x.shape
    outs = []
    for i in range(0, T - window_length + 1, stride):
        win = x[:, i:i + window_length, :]                 # (B, W, F)
        pcc = jnp.einsum("bwf,bwg->bfg", win, win) / window_length
        outs.append(pcc)
    return jnp.stack(outs, axis=1)                         # (B, NW, F, F)


if __name__ == "__main__":
    # Small shapes consistent with the module's forward.
    B, T, F = 2, 16, 8
    window_length, stride = 8, 4          # -> num_windows = 3

    key = jax.random.PRNGKey(0)
    x = jax.random.normal(key, (B, T, F), dtype=jnp.float32)

    ref = sliding_window_pcc_ref(x, window_length, stride)

    out = sliding_window_pcc(x, window_length, stride)
    out = jax.block_until_ready(out)
    assert out.shape == ref.shape, (out.shape, ref.shape)
    assert jnp.allclose(out, ref, atol=1e-5, rtol=1e-5), "mismatch vs reference"

    # Exercise the ragged last window-block (num_windows=3, wb=2): pl.when tail
    # guard + partial output-block writeback masking.
    out2 = sliding_window_pcc(x, window_length, stride, windows_per_block=2)
    out2 = jax.block_until_ready(out2)
    assert jnp.allclose(out2, ref, atol=1e-5, rtol=1e-5), "mismatch (ragged block)"

    print("KERNEL_OK")
</pallas_src>

<mosaic_0001>
module attributes {stable_mosaic.version = 11 : i64} {
  func.func @_pcc_kernel(%arg0: i32, %arg1: i32, %arg2: memref<1x16x128xf32, #tpu.memory_space<vmem>>, %arg3: memref<1x3x128x128xf32, #tpu.memory_space<vmem>>) attributes {dimension_semantics = [#tpu.dimension_semantics<parallel>, #tpu.dimension_semantics<parallel>], iteration_bounds = array<i64: 2, 1>, scalar_prefetch = 0 : i64, scratch_operands = 0 : i64, tpu.core_type = #tpu.core_type<tc>, window_params = [{transform_indices = @transform_0, window_bounds = array<i64: 1, 16, 128>}, {transform_indices = @transform_1, window_bounds = array<i64: 1, 3, 128, 128>}]} {
    %cst = arith.constant 1.250000e-01 : f32
    %c0_i32 = arith.constant 0 : i32
    %c3_i32 = arith.constant 3 : i32
    %0 = arith.muli %arg1, %c3_i32 : i32
    %1 = arith.addi %0, %c0_i32 : i32
    %c3_i32_0 = arith.constant 3 : i32
    %2 = arith.cmpi slt, %1, %c3_i32_0 : i32
    %3 = arith.extui %2 : i1 to i32
    %c0_i32_1 = arith.constant 0 : i32
    %4 = arith.cmpi ne, %3, %c0_i32_1 : i32
    scf.if %4 {
      %c4_i32 = arith.constant 4 : i32
      %15 = arith.muli %1, %c4_i32 : i32
      %c0 = arith.constant 0 : index
      %16 = arith.index_cast %15 : i32 to index
      %c0_9 = arith.constant 0 : index
      %17 = vector.load %arg2[%c0, %16, %c0_9] : memref<1x16x128xf32, #tpu.memory_space<vmem>>, vector<1x8x128xf32>
      %18 = vector.shape_cast %17 : vector<1x8x128xf32> to vector<8x128xf32>
      %19 = vector.broadcast %cst : f32 to vector<8x128xf32>
      %20 = arith.mulf %18, %19 : vector<8x128xf32>
      %cst_10 = arith.constant dense<0.000000e+00> : vector<128x128xf32>
      %21 = tpu.matmul %20, %18, %cst_10 {dimension_numbers = #tpu.dot_dimension_numbers<[0], [0], [1], [1], [0, 1, 1, 1], [], []>} : vector<8x128xf32>, vector<8x128xf32>, vector<128x128xf32> -> vector<128x128xf32>
      %c0_11 = arith.constant 0 : index
      %22 = arith.index_cast %c0_i32 : i32 to index
      %c0_12 = arith.constant 0 : index
      %c0_13 = arith.constant 0 : index
      %23 = vector.load %arg3[%c0_11, %22, %c0_12, %c0_13] : memref<1x3x128x128xf32, #tpu.memory_space<vmem>>, vector<1x1x128x128xf32>
      %24 = vector.shape_cast %23 : vector<1x1x128x128xf32> to vector<128x128xf32>
      %25 = vector.shape_cast %21 : vector<128x128xf32> to vector<1x1x128x128xf32>
      tpu.vector_store %arg3[%c0_11, %22, %c0_12, %c0_13], %25 {strides = array<i32>} : memref<1x3x128x128xf32, #tpu.memory_space<vmem>>, vector<1x1x128x128xf32>,
    } else {
    }
    %c1_i32 = arith.constant 1 : i32
    %c3_i32_2 = arith.constant 3 : i32
    %5 = arith.muli %arg1, %c3_i32_2 : i32
    %6 = arith.addi %5, %c1_i32 : i32
    %c3_i32_3 = arith.constant 3 : i32
    %7 = arith.cmpi slt, %6, %c3_i32_3 : i32
    %8 = arith.extui %7 : i1 to i32
    %c0_i32_4 = arith.constant 0 : i32
    %9 = arith.cmpi ne, %8, %c0_i32_4 : i32
    scf.if %9 {
      %c4_i32 = arith.constant 4 : i32
      %15 = arith.muli %6, %c4_i32 : i32
      %c0 = arith.constant 0 : index
      %16 = arith.index_cast %15 : i32 to index
      %c0_9 = arith.constant 0 : index
      %17 = vector.load %arg2[%c0, %16, %c0_9] : memref<1x16x128xf32, #tpu.memory_space<vmem>>, vector<1x8x128xf32>
      %18 = vector.shape_cast %17 : vector<1x8x128xf32> to vector<8x128xf32>
      %19 = vector.broadcast %cst : f32 to vector<8x128xf32>
      %20 = arith.mulf %18, %19 : vector<8x128xf32>
      %cst_10 = arith.constant dense<0.000000e+00> : vector<128x128xf32>
      %21 = tpu.matmul %20, %18, %cst_10 {dimension_numbers = #tpu.dot_dimension_numbers<[0], [0], [1], [1], [0, 1, 1, 1], [], []>} : vector<8x128xf32>, vector<8x128xf32>, vector<128x128xf32> -> vector<128x128xf32>
      %c0_11 = arith.constant 0 : index
      %22 = arith.index_cast %c1_i32 : i32 to index
      %c0_12 = arith.constant 0 : index
      %c0_13 = arith.constant 0 : index
      %23 = vector.load %arg3[%c0_11, %22, %c0_12, %c0_13] : memref<1x3x128x128xf32, #tpu.memory_space<vmem>>, vector<1x1x128x128xf32>
      %24 = vector.shape_cast %23 : vector<1x1x128x128xf32> to vector<128x128xf32>
      %25 = vector.shape_cast %21 : vector<128x128xf32> to vector<1x1x128x128xf32>
      tpu.vector_store %arg3[%c0_11, %22, %c0_12, %c0_13], %25 {strides = array<i32>} : memref<1x3x128x128xf32, #tpu.memory_space<vmem>>, vector<1x1x128x128xf32>,
    } else {
    }
    %c2_i32 = arith.constant 2 : i32
    %c3_i32_5 = arith.constant 3 : i32
    %10 = arith.muli %arg1, %c3_i32_5 : i32
    %11 = arith.addi %10, %c2_i32 : i32
    %c3_i32_6 = arith.constant 3 : i32
    %12 = arith.cmpi slt, %11, %c3_i32_6 : i32
    %13 = arith.extui %12 : i1 to i32
    %c0_i32_7 = arith.constant 0 : i32
    %14 = arith.cmpi ne, %13, %c0_i32_7 : i32
    scf.if %14 {
      %c4_i32 = arith.constant 4 : i32
      %15 = arith.muli %11, %c4_i32 : i32
      %c0 = arith.constant 0 : index
      %16 = arith.index_cast %15 : i32 to index
      %c0_9 = arith.constant 0 : index
      %17 = vector.load %arg2[%c0, %16, %c0_9] : memref<1x16x128xf32, #tpu.memory_space<vmem>>, vector<1x8x128xf32>
      %18 = vector.shape_cast %17 : vector<1x8x128xf32> to vector<8x128xf32>
      %19 = vector.broadcast %cst : f32 to vector<8x128xf32>
      %20 = arith.mulf %18, %19 : vector<8x128xf32>
      %cst_10 = arith.constant dense<0.000000e+00> : vector<128x128xf32>
      %21 = tpu.matmul %20, %18, %cst_10 {dimension_numbers = #tpu.dot_dimension_numbers<[0], [0], [1], [1], [0, 1, 1, 1], [], []>} : vector<8x128xf32>, vector<8x128xf32>, vector<128x128xf32> -> vector<128x128xf32>
      %c0_11 = arith.constant 0 : index
      %22 = arith.index_cast %c2_i32 : i32 to index
      %c0_12 = arith.constant 0 : index
      %c0_13 = arith.constant 0 : index
      %23 = vector.load %arg3[%c0_11, %22, %c0_12, %c0_13] : memref<1x3x128x128xf32, #tpu.memory_space<vmem>>, vector<1x1x128x128xf32>
      %24 = vector.shape_cast %23 : vector<1x1x128x128xf32> to vector<128x128xf32>
      %25 = vector.shape_cast %21 : vector<128x128xf32> to vector<1x1x128x128xf32>
      tpu.vector_store %arg3[%c0_11, %22, %c0_12, %c0_13], %25 {strides = array<i32>} : memref<1x3x128x128xf32, #tpu.memory_space<vmem>>, vector<1x1x128x128xf32>,
    } else {
    }
    %c3_i32_8 = arith.constant 3 : i32
    return
  }
  func.func @transform_0(%arg0: i32, %arg1: i32) -> (i32, i32, i32) {
    %c0_i32 = arith.constant 0 : i32
    %c0_i32_0 = arith.constant 0 : i32
    %c0_i32_1 = arith.constant 0 : i32
    return %arg0, %c0_i32, %c0_i32_0 : i32, i32, i32
  }
  func.func @transform_1(%arg0: i32, %arg1: i32) -> (i32, i32, i32, i32) {
    %c0_i32 = arith.constant 0 : i32
    %c0_i32_0 = arith.constant 0 : i32
    %c0_i32_1 = arith.constant 0 : i32
    return %arg0, %arg1, %c0_i32, %c0_i32_0 : i32, i32, i32, i32
  }
}

</mosaic_0001>

<llo_original>
// kernel: tpu_custom_call.1
$region0: #{tpu_custom_call.1}
  #allocation0 [shape = 'u32[]', space=smem, size = 0x4, offset = 0x4, fixed_abs, tag = 'smem constant byte address 0x4 - core index']
  #allocation1 [shape = 'u32[144,128]{1,0:T(1,128)}', space=vmem, size = 0x12000, scoped, tag = 'internal scratch']
  %s0 = inlined_call_operand.hbm [shape: f32[2,16,128], index: 0, kind: input, shape index: {}]
  %s1 = inlined_call_operand.hbm [shape: f32[2,3,128,128], index: 1, kind: output, shape index: {}]
  %s2 = sld [smem:[#allocation0]]
  $region53: #{tpu_custom_call.1} parent=0
    _
  %s4 = ssub.s32 1, %s2
  %s5 = scalar_select 0, %s4, %s2
  $region1: #{tpu_custom_call.1} parent=0
    #allocation2 [shape = 'u8[16384]{0}', space=vmem, size = 0x4000, scoped, tag = 'input window, operand 0']
    #allocation3 [shape = 's32[2]{0}', space=sflag, size = 0x8, scoped, tag = 'scoped memory for tpu_custom_call.1']
    #allocation4 [shape = 's32[2]{0}', space=sflag, size = 0x8, scoped, tag = 'scoped memory for tpu_custom_call.1']
    #allocation5 [shape = 'u8[393216]{0}', space=vmem, size = 0x60000, scoped, tag = 'output window, operand 0']
    %6 = vsyncpa [#allocation3], 0
    %s7 = scalar_lea.sflag [#allocation3], 1
    %8 = vsyncpa %s7, 0
    %9 = vsyncpa [#allocation4], 0
    %s10 = scalar_lea.sflag [#allocation4], 1
    %11 = vsyncpa %s10, 0
    loop: start=0, step=1, limit=4
    $region2: #{tpu_custom_call.1} parent=1 // loop_pre_header
      _
    $region3: #{tpu_custom_call.1} parent=1 // loop_header
      %s13 = sphi 0, %s17
      %p14 = scmp.ge.s32.totalorder %s13, 4
      %s20 = sphi 0, %s32
      %s21 = sphi 0, %s28
      %s22 = sphi 0, %s20
      %s23 = sphi 0, %s21
      %s24 = sphi 0, %s22
      %s25 = sphi 0, %s23
      %s35 = sphi 0, %s37
      %s38 = sphi 0, %s35
      %s39 = sphi 0, %s38
      %s55 = sphi 0, %s39
      %s63 = sphi 0, %s65
      %s66 = sphi 0, %s63
      %s67 = sphi 0, %s66
      %s83 = sphi 0, %s67
    $region4: #{tpu_custom_call.1} parent=1 // loop_header_branch
      %16 = sbr.rel (%p14) target = $region8
    $region5: #{tpu_custom_call.1} parent=1 // loop_body
      %s18 = ssub.s32 %s13, 1
      %s19 = ssub.s32 %s13, 2
      %s26 = sadd.s32 1, %s21
      %p27 = scmp.ge.s32.totalorder %s26, 1
      %s28 = scalar_select %p27, 0, %s26
      %s29 = sadd.s32 1, %s20
      %s30 = scalar_select %p27, %s29, %s20
      %p31 = scmp.ge.s32.totalorder %s30, 2
      %s32 = scalar_select %p31, 0, %s30
      %s33 = ssub.s32 %s20, %s32
      %p34 = scmp.eq.s32.totalorder %s33, 0
      %s36 = sadd.s32 %s35, 1
      %s37 = scalar_select %p34, %s35, %s36
      %p40 = pneg %p34
      %p41 = scmp.eq.s32.totalorder %s13, 1
      %p42 = por %p40, %p41
      %p43 = scmp.ne.s32.totalorder %s35, %s38
      %p44 = scmp.eq.s32.totalorder %s13, 0
      %p45 = por %p43, %p44
      %p46 = scmp.ne.s32.totalorder %s35, %s38
      %p47 = scmp.eq.s32.totalorder %s18, 1
      %p48 = por %p46, %p47
      %p49 = scmp.ne.s32.totalorder %s38, %s39
      %p50 = scmp.eq.s32.totalorder %s18, 0
      %p51 = por %p49, %p50
      %p52 = scmp.ne.s32.totalorder %s38, %s39
      %p53 = scmp.eq.s32.totalorder %s19, 1
      %p54 = por %p52, %p53
      %p56 = scmp.ne.s32.totalorder %s39, %s55
      %p57 = scmp.eq.s32.totalorder %s19, 0
      %p58 = por %p56, %p57
      %s59 = ssub.s32 %s20, %s32
      %s60 = ssub.s32 %s21, %s28
      %s61 = sor.u32 %s59, %s60
      %p62 = scmp.eq.s32.totalorder %s61, 0
      %s64 = sadd.s32 %s63, 1
      %s65 = scalar_select %p62, %s63, %s64
      %p68 = pneg %p62
      %p69 = scmp.eq.s32.totalorder %s13, 1
      %p70 = por %p68, %p69
      %p71 = scmp.ne.s32.totalorder %s63, %s66
      %p72 = scmp.eq.s32.totalorder %s13, 0
      %p73 = por %p71, %p72
      %p74 = scmp.ne.s32.totalorder %s63, %s66
      %p75 = scmp.eq.s32.totalorder %s18, 1
      %p76 = por %p74, %p75
      %p77 = scmp.ne.s32.totalorder %s66, %s67
      %p78 = scmp.eq.s32.totalorder %s18, 0
      %p79 = por %p77, %p78
      %p80 = scmp.ne.s32.totalorder %s66, %s67
      %p81 = scmp.eq.s32.totalorder %s19, 1
      %p82 = por %p80, %p81
      %p84 = scmp.ne.s32.totalorder %s67, %s83
      %p85 = scmp.eq.s32.totalorder %s19, 0
      %p86 = por %p84, %p85
      %p87 = scmp.le.s32.totalorder 1, %s13
      %p88 = scmp.lt.s32.totalorder %s13, 3
      %p89 = pnand %p87, %p88
      %p90 = pneg %p89
      // Predicated region
      $region9: #{tpu_custom_call.1} parent=5 // pred_check
        _
      $region10: #{tpu_custom_call.1} parent=5 // pred_check_branch
        %92 = sbr.rel (%p89) target = $region12
      $region11: #{tpu_custom_call.1} parent=5 // pred_region
        %s93 = ssub.s32 %s13, 1
      $region12: #{tpu_custom_call.1} parent=5 // pred_fallthru
        _
      %p94 = scmp.lt.s32.totalorder %s13, 2
      // Predicated region
      $region13: #{tpu_custom_call.1} parent=5 // pred_check
        %p95 = pneg %p94
      $region14: #{tpu_custom_call.1} parent=5 // pred_check_branch
        %97 = sbr.rel (%p95) target = $region16
      $region15: #{tpu_custom_call.1} parent=5 // pred_region
        // Predicated region
        $region17: #{tpu_custom_call.1} parent=15 // pred_check
          %p98 = pneg %p45
        $region18: #{tpu_custom_call.1} parent=15 // pred_check_branch
          %100 = sbr.rel (%p98) target = $region20
        $region19: #{tpu_custom_call.1} parent=15 // pred_region
          %s101 = sand.u32 %s35, 1
          %s102 = scalar_lea.sflag [#allocation3], %s101
          %s103 = sand.u32 %s35, 1
          %s104 = smul.addr %s103, 16
          %s105 = scalar_lea.vmem [#allocation2], %s104
          %s107 = ssub.s32 256, 256
          %108 = vsyncadd %s102, %s107
          %s109 = smul.addr %s20, 2
          %s110 = smul.addr %s109, 128
          %s111 = scalar_lea.hbm %s0, %s110
          %s112 = sshll.u32 %s105, 4
          %s113 = int_to_ptr.vmem [resolvable:$true] %s112
          %118 = dma.hbm_to_vmem [thread:$0]  %s111, 256, %s113, %s102, 128, 128, 8
        $region20: #{tpu_custom_call.1} parent=15 // pred_fallthru
          _
      $region16: #{tpu_custom_call.1} parent=5 // pred_fallthru
        _
      %p119 = scmp.le.s32.totalorder 1, %s13
      %p120 = scmp.lt.s32.totalorder %s13, 3
      %p121 = pnand %p119, %p120
      %p122 = pneg %p121
      // Predicated region
      $region21: #{tpu_custom_call.1} parent=5 // pred_check
        _
      $region22: #{tpu_custom_call.1} parent=5 // pred_check_branch
        %124 = sbr.rel (%p121) target = $region24
      $region23: #{tpu_custom_call.1} parent=5 // pred_region
        %s125 = ssub.s32 %s13, 1
        %s126 = sand.u32 %s38, 1
        %s127 = scalar_lea.sflag [#allocation3], %s126
        %s128 = sand.u32 %s38, 1
        %s129 = smul.addr %s128, 16
        %s130 = scalar_lea.vmem [#allocation2], %s129
        // Predicated region
        $region25: #{tpu_custom_call.1} parent=23 // pred_check
          %p131 = pneg %p51
        $region26: #{tpu_custom_call.1} parent=23 // pred_check_branch
          %133 = sbr.rel (%p131) target = $region28
        $region27: #{tpu_custom_call.1} parent=23 // pred_region
          %134 = dma.done %s127, 256
        $region28: #{tpu_custom_call.1} parent=23 // pred_fallthru
          _
        %s135 = sand.u32 %s38, 1
        %s136 = scalar_lea.sflag [#allocation3], %s135
        %s137 = sand.u32 %s38, 1
        %s138 = smul.addr %s137, 16
        %s139 = scalar_lea.vmem [#allocation2], %s138
        %p140 = pneg %p51
        %p141 = pneg %p48
        %p142 = pneg %p79
        %p143 = pneg %p76
        %s144 = sand.u32 %s66, 1
        %s145 = scalar_lea.sflag [#allocation4], %s144
        %s146 = sand.u32 %s66, 1
        %s147 = smul.addr %s146, 384
        %s148 = scalar_lea.vmem [#allocation5], %s147
        %s149 = smul.u32 3, %s23
        %s150 = smul.u32 %s23, 3
        %p151 = scmp.lt.s32.totalorder %s150, 3
        // Predicated region
        $region29: #{tpu_custom_call.1} parent=23 // pred_check
          %p152 = pneg %p151
        $region30: #{tpu_custom_call.1} parent=23 // pred_check_branch
          %154 = sbr.rel (%p152) target = $region32
        $region31: #{tpu_custom_call.1} parent=23 // pred_region
          %s155 = smul.u32 %s23, 12
          %s156 = scalar_lea.vmem %s130, %s155 [#allocation2]
          %v157 = vld [vmem:[%s156] sm:$0xff]
          %v158 = vmul.f32 %v157, 0.125
          %159 = vxpose.xlu0.b32.start [1/16] %v158, 128
          %160 = vxpose.xlu0.b32.cont [2/16] 0.0, 128
          %161 = vxpose.xlu0.b32.cont [3/16] 0.0, 128
          %162 = vxpose.xlu0.b32.cont [4/16] 0.0, 128
          %163 = vxpose.xlu0.b32.cont [5/16] 0.0, 128
          %164 = vxpose.xlu0.b32.cont [6/16] 0.0, 128
          %165 = vxpose.xlu0.b32.cont [7/16] 0.0, 128
          %166 = vxpose.xlu0.b32.cont [8/16] 0.0, 128
          %167 = vxpose.xlu0.b32.cont [9/16] 0.0, 128
          %168 = vxpose.xlu0.b32.cont [10/16] 0.0, 128
          %169 = vxpose.xlu0.b32.cont [11/16] 0.0, 128
          %170 = vxpose.xlu0.b32.cont [12/16] 0.0, 128
          %171 = vxpose.xlu0.b32.cont [13/16] 0.0, 128
          %172 = vxpose.xlu0.b32.cont [14/16] 0.0, 128
          %173 = vxpose.xlu0.b32.cont [15/16] 0.0, 128
          %174 = vxpose.xlu0.b32.end [16/16] 0.0, 128
          %v175 = vpop.trf.xlu0
          %v176 = vpop.trf.xlu0
          %v177 = vpop.trf.xlu0
          %v178 = vpop.trf.xlu0
          %v179 = vpop.trf.xlu0
          %v180 = vpop.trf.xlu0
          %v181 = vpop.trf.xlu0
          %v182 = vpop.trf.xlu0
          %v183 = vpop.trf.xlu0
          %v184 = vpop.trf.xlu0
          %v185 = vpop.trf.xlu0
          %v186 = vpop.trf.xlu0
          %v187 = vpop.trf.xlu0
          %v188 = vpop.trf.xlu0
          %v189 = vpop.trf.xlu0
          %v190 = vpop.trf.xlu0
          %vm191 = vcmask 64512
          %v193 = vsel %vm191, %v175, 0
          %v196 = vsel %vm191, %v176, 0
          %v199 = vsel %vm191, %v177, 0
          %v202 = vsel %vm191, %v178, 0
          %v205 = vsel %vm191, %v179, 0
          %v208 = vsel %vm191, %v180, 0
          %v211 = vsel %vm191, %v181, 0
          %v214 = vsel %vm191, %v182, 0
          %v217 = vsel %vm191, %v183, 0
          %v220 = vsel %vm191, %v184, 0
          %v223 = vsel %vm191, %v185, 0
          %v226 = vsel %vm191, %v186, 0
          %v229 = vsel %vm191, %v187, 0
          %v232 = vsel %vm191, %v188, 0
          %v235 = vsel %vm191, %v189, 0
          %v238 = vsel %vm191, %v190, 0
          %240 = vmatprep.subr.mxu0 0.0
          %241 = vmatpush1.msra.mxu0 %v157
          %242 = vmatprep.subr.mxu0 0.0
          %243 = vmatpush1.msra.mxu0 0.0
          %244 = vmatprep.subr.mxu0 0.0
          %245 = vmatpush1.msra.mxu0 0.0
          %246 = vmatprep.subr.mxu0 0.0
          %247 = vmatpush1.msra.mxu0 0.0
          %248 = vmatprep.subr.mxu0 0.0
          %249 = vmatpush1.msra.mxu0 0.0
          %250 = vmatprep.subr.mxu0 0.0
          %251 = vmatpush1.msra.mxu0 0.0
          %252 = vmatprep.subr.mxu0 0.0
          %253 = vmatpush1.msra.mxu0 0.0
          %254 = vmatprep.subr.mxu0 0.0
          %255 = vmatpush1.msra.mxu0 0.0
          %256 = vmatprep.subr.mxu0 0.0
          %257 = vmatpush1.msra.mxu0 0.0
          %258 = vmatprep.subr.mxu0 0.0
          %259 = vmatpush1.msra.mxu0 0.0
          %260 = vmatprep.subr.mxu0 0.0
          %261 = vmatpush1.msra.mxu0 0.0
          %262 = vmatprep.subr.mxu0 0.0
          %263 = vmatpush1.msra.mxu0 0.0
          %264 = vmatprep.subr.mxu0 0.0
          %265 = vmatpush1.msra.mxu0 0.0
          %266 = vmatprep.subr.mxu0 0.0
          %267 = vmatpush1.msra.mxu0 0.0
          %268 = vmatprep.subr.mxu0 0.0
          %269 = vmatpush1.msra.mxu0 0.0
          %270 = vmatprep.subr.mxu0 0.0
          %271 = vmatpush1.msra.mxu0 0.0
          %272 = vmatprep.subr.mxu0 0.0
          %273 = vmatpush1.msra.mxu0 0.0
          %274 = vmatprep.subr.mxu0 0.0
          %275 = vmatpush1.msra.mxu0 0.0
          %276 = vmatprep.subr.mxu0 0.0
          %277 = vmatpush1.msra.mxu0 0.0
          %278 = vmatprep.subr.mxu0 0.0
          %279 = vmatpush1.msra.mxu0 0.0
          %280 = vmatprep.subr.mxu0 0.0
          %281 = vmatpush1.msra.mxu0 0.0
          %282 = vmatprep.subr.mxu0 0.0
          %283 = vmatpush1.msra.mxu0 0.0
          %284 = vmatprep.subr.mxu0 0.0
          %285 = vmatpush1.msra.mxu0 0.0
          %286 = vmatprep.subr.mxu0 0.0
          %287 = vmatpush1.msra.mxu0 0.0
          %288 = vmatprep.subr.mxu0 0.0
          %289 = vmatpush1.msra.mxu0 0.0
          %290 = vmatprep.subr.mxu0 0.0
          %291 = vmatpush1.msra.mxu0 0.0
          %292 = vmatprep.subr.mxu0 0.0
          %293 = vmatpush1.msra.mxu0 0.0
          %294 = vmatprep.subr.mxu0 0.0
          %295 = vmatpush1.msra.mxu0 0.0
          %296 = vmatprep.subr.mxu0 0.0
          %297 = vmatpush1.msra.mxu0 0.0
          %298 = vmatprep.subr.mxu0 0.0
          %299 = vmatpush1.msra.mxu0 0.0
          %300 = vmatprep.subr.mxu0 0.0
          %301 = vmatpush1.msra.mxu0 0.0
          %302 = vmatprep.subr.mxu0 0.0
          %303 = vmatpush1.msra.mxu0 0.0
          %304 = vmatprep.mubr.f32.mxu0 0.0
          %305 = vmatmul.mubr.f32.gmra.mrb[0].mxu0 %v193
          %v306 = vpop.f32.mrb[0].mxu0
          %v307 = vadd.f32 0.0, %v306
          %v308 = vpop.f32.mrb[0].mxu0
          %309 = vmatprep.mubr.f32.mxu0 0.0
          %310 = vmatmul.mubr.f32.gmra.mrb[0].mxu0 %v196
          %v311 = vpop.f32.mrb[0].mxu0
          %v312 = vadd.f32 0.0, %v311
          %v313 = vpop.f32.mrb[0].mxu0
          %314 = vmatprep.mubr.f32.mxu0 0.0
          %315 = vmatmul.mubr.f32.gmra.mrb[0].mxu0 %v199
          %v316 = vpop.f32.mrb[0].mxu0
          %v317 = vadd.f32 0.0, %v316
          %v318 = vpop.f32.mrb[0].mxu0
          %319 = vmatprep.mubr.f32.mxu0 0.0
          %320 = vmatmul.mubr.f32.gmra.mrb[0].mxu0 %v202
          %v321 = vpop.f32.mrb[0].mxu0
          %v322 = vadd.f32 0.0, %v321
          %v323 = vpop.f32.mrb[0].mxu0
          %324 = vmatprep.mubr.f32.mxu0 0.0
          %325 = vmatmul.mubr.f32.gmra.mrb[0].mxu0 %v205
          %v326 = vpop.f32.mrb[0].mxu0
          %v327 = vadd.f32 0.0, %v326
          %v328 = vpop.f32.mrb[0].mxu0
          %329 = vmatprep.mubr.f32.mxu0 0.0
          %330 = vmatmul.mubr.f32.gmra.mrb[0].mxu0 %v208
          %v331 = vpop.f32.mrb[0].mxu0
          %v332 = vadd.f32 0.0, %v331
          %v333 = vpop.f32.mrb[0].mxu0
          %334 = vmatprep.mubr.f32.mxu0 0.0
          %335 = vmatmul.mubr.f32.gmra.mrb[0].mxu0 %v211
          %v336 = vpop.f32.mrb[0].mxu0
          %v337 = vadd.f32 0.0, %v336
          %v338 = vpop.f32.mrb[0].mxu0
          %339 = vmatprep.mubr.f32.mxu0 0.0
          %340 = vmatmul.mubr.f32.gmra.mrb[0].mxu0 %v214
          %v341 = vpop.f32.mrb[0].mxu0
          %v342 = vadd.f32 0.0, %v341
          %v343 = vpop.f32.mrb[0].mxu0
          %344 = vmatprep.mubr.f32.mxu0 0.0
          %345 = vmatmul.mubr.f32.gmra.mrb[0].mxu0 %v217
          %v346 = vpop.f32.mrb[0].mxu0
          %v347 = vadd.f32 0.0, %v346
          %v348 = vpop.f32.mrb[0].mxu0
          %349 = vmatprep.mubr.f32.mxu0 0.0
          %350 = vmatmul.mubr.f32.gmra.mrb[0].mxu0 %v220
          %v351 = vpop.f32.mrb[0].mxu0
          %v352 = vadd.f32 0.0, %v351
          %v353 = vpop.f32.mrb[0].mxu0
          %354 = vmatprep.mubr.f32.mxu0 0.0
          %355 = vmatmul.mubr.f32.gmra.mrb[0].mxu0 %v223
          %v356 = vpop.f32.mrb[0].mxu0
          %v357 = vadd.f32 0.0, %v356
          %v358 = vpop.f32.mrb[0].mxu0
          %359 = vmatprep.mubr.f32.mxu0 0.0
          %360 = vmatmul.mubr.f32.gmra.mrb[0].mxu0 %v226
          %v361 = vpop.f32.mrb[0].mxu0
          %v362 = vadd.f32 0.0, %v361
          %v363 = vpop.f32.mrb[0].mxu0
          %364 = vmatprep.mubr.f32.mxu0 0.0
          %365 = vmatmul.mubr.f32.gmra.mrb[0].mxu0 %v229
          %v366 = vpop.f32.mrb[0].mxu0
          %v367 = vadd.f32 0.0, %v366
          %v368 = vpop.f32.mrb[0].mxu0
          %369 = vmatprep.mubr.f32.mxu0 0.0
          %370 = vmatmul.mubr.f32.gmra.mrb[0].mxu0 %v232
          %v371 = vpop.f32.mrb[0].mxu0
          %v372 = vadd.f32 0.0, %v371
          %v373 = vpop.f32.mrb[0].mxu0
          %374 = vmatprep.mubr.f32.mxu0 0.0
          %375 = vmatmul.mubr.f32.gmra.mrb[0].mxu0 %v235
          %v376 = vpop.f32.mrb[0].mxu0
          %v377 = vadd.f32 0.0, %v376
          %v378 = vpop.f32.mrb[0].mxu0
          %379 = vmatprep.mubr.f32.mxu0 0.0
          %380 = vmatmul.mubr.f32.gmra.mrb[0].mxu0 %v238
          %v381 = vpop.f32.mrb[0].mxu0
          %v382 = vadd.f32 0.0, %v381
          %v383 = vpop.f32.mrb[0].mxu0
          %384 = vdwg.mxu0
          %385 = vst [vmem:[%s148] sm:$0xff] %v307
          %386 = vst [vmem:[%s148 + $0x8] sm:$0xff] %v312
          %387 = vst [vmem:[%s148 + $0x10] sm:$0xff] %v317
          %388 = vst [vmem:[%s148 + $0x18] sm:$0xff] %v322
          %389 = vst [vmem:[%s148 + $0x20] sm:$0xff] %v327
          %390 = vst [vmem:[%s148 + $0x28] sm:$0xff] %v332
          %391 = vst [vmem:[%s148 + $0x30] sm:$0xff] %v337
          %392 = vst [vmem:[%s148 + $0x38] sm:$0xff] %v342
          %393 = vst [vmem:[%s148 + $0x40] sm:$0xff] %v347
          %394 = vst [vmem:[%s148 + $0x48] sm:$0xff] %v352
          %395 = vst [vmem:[%s148 + $0x50] sm:$0xff] %v357
          %396 = vst [vmem:[%s148 + $0x58] sm:$0xff] %v362
          %397 = vst [vmem:[%s148 + $0x60] sm:$0xff] %v367
          %398 = vst [vmem:[%s148 + $0x68] sm:$0xff] %v372
          %399 = vst [vmem:[%s148 + $0x70] sm:$0xff] %v377
          %400 = vst [vmem:[%s148 + $0x78] sm:$0xff] %v382
        $region32: #{tpu_custom_call.1} parent=23 // pred_fallthru
          _
        %s401 = sadd.s32 %s150, 1
        %p402 = scmp.lt.s32.totalorder %s401, 3
        // Predicated region
        $region33: #{tpu_custom_call.1} parent=23 // pred_check
          %p403 = pneg %p402
        $region34: #{tpu_custom_call.1} parent=23 // pred_check_branch
          %405 = sbr.rel (%p403) target = $region36
        $region35: #{tpu_custom_call.1} parent=23 // pred_region
          %s406 = smul.u32 %s401, 4
          %s407 = scalar_lea.vmem %s130, %s406 [#allocation2]
          %v408 = vld [vmem:[%s407] sm:$0xff]
          %v409 = vmul.f32 %v408, 0.125
          %410 = vxpose.xlu0.b32.start [1/16] %v409, 128
          %411 = vxpose.xlu0.b32.cont [2/16] 0.0, 128
          %412 = vxpose.xlu0.b32.cont [3/16] 0.0, 128
          %413 = vxpose.xlu0.b32.cont [4/16] 0.0, 128
          %414 = vxpose.xlu0.b32.cont [5/16] 0.0, 128
          %415 = vxpose.xlu0.b32.cont [6/16] 0.0, 128
          %416 = vxpose.xlu0.b32.cont [7/16] 0.0, 128
          %417 = vxpose.xlu0.b32.cont [8/16] 0.0, 128
          %418 = vxpose.xlu0.b32.cont [9/16] 0.0, 128
          %419 = vxpose.xlu0.b32.cont [10/16] 0.0, 128
          %420 = vxpose.xlu0.b32.cont [11/16] 0.0, 128
          %421 = vxpose.xlu0.b32.cont [12/16] 0.0, 128
          %422 = vxpose.xlu0.b32.cont [13/16] 0.0, 128
          %423 = vxpose.xlu0.b32.cont [14/16] 0.0, 128
          %424 = vxpose.xlu0.b32.cont [15/16] 0.0, 128
          %425 = vxpose.xlu0.b32.end [16/16] 0.0, 128
          %v426 = vpop.trf.xlu0
          %v427 = vpop.trf.xlu0
          %v428 = vpop.trf.xlu0
          %v429 = vpop.trf.xlu0
          %v430 = vpop.trf.xlu0
          %v431 = vpop.trf.xlu0
          %v432 = vpop.trf.xlu0
          %v433 = vpop.trf.xlu0
          %v434 = vpop.trf.xlu0
          %v435 = vpop.trf.xlu0
          %v436 = vpop.trf.xlu0
          %v437 = vpop.trf.xlu0
          %v438 = vpop.trf.xlu0
          %v439 = vpop.trf.xlu0
          %v440 = vpop.trf.xlu0
          %v441 = vpop.trf.xlu0
          %vm442 = vcmask 64512
          %v444 = vsel %vm442, %v426, 0
          %v447 = vsel %vm442, %v427, 0
          %v450 = vsel %vm442, %v428, 0
          %v453 = vsel %vm442, %v429, 0
          %v456 = vsel %vm442, %v430, 0
          %v459 = vsel %vm442, %v431, 0
          %v462 = vsel %vm442, %v432, 0
          %v465 = vsel %vm442, %v433, 0
          %v468 = vsel %vm442, %v434, 0
          %v471 = vsel %vm442, %v435, 0
          %v474 = vsel %vm442, %v436, 0
          %v477 = vsel %vm442, %v437, 0
          %v480 = vsel %vm442, %v438, 0
          %v483 = vsel %vm442, %v439, 0
          %v486 = vsel %vm442, %v440, 0
          %v489 = vsel %vm442, %v441, 0
          %491 = vmatprep.subr.mxu0 0.0
          %492 = vmatpush1.msra.mxu0 %v408
          %493 = vmatprep.subr.mxu0 0.0
          %494 = vmatpush1.msra.mxu0 0.0
          %495 = vmatprep.subr.mxu0 0.0
          %496 = vmatpush1.msra.mxu0 0.0
          %497 = vmatprep.subr.mxu0 0.0
          %498 = vmatpush1.msra.mxu0 0.0
          %499 = vmatprep.subr.mxu0 0.0
          %500 = vmatpush1.msra.mxu0 0.0
          %501 = vmatprep.subr.mxu0 0.0
          %502 = vmatpush1.msra.mxu0 0.0
          %503 = vmatprep.subr.mxu0 0.0
          %504 = vmatpush1.msra.mxu0 0.0
          %505 = vmatprep.subr.mxu0 0.0
          %506 = vmatpush1.msra.mxu0 0.0
          %507 = vmatprep.subr.mxu0 0.0
          %508 = vmatpush1.msra.mxu0 0.0
          %509 = vmatprep.subr.mxu0 0.0
          %510 = vmatpush1.msra.mxu0 0.0
          %511 = vmatprep.subr.mxu0 0.0
          %512 = vmatpush1.msra.mxu0 0.0
          %513 = vmatprep.subr.mxu0 0.0
          %514 = vmatpush1.msra.mxu0 0.0
          %515 = vmatprep.subr.mxu0 0.0
          %516 = vmatpush1.msra.mxu0 0.0
          %517 = vmatprep.subr.mxu0 0.0
          %518 = vmatpush1.msra.mxu0 0.0
          %519 = vmatprep.subr.mxu0 0.0
          %520 = vmatpush1.msra.mxu0 0.0
          %521 = vmatprep.subr.mxu0 0.0
          %522 = vmatpush1.msra.mxu0 0.0
          %523 = vmatprep.subr.mxu0 0.0
          %524 = vmatpush1.msra.mxu0 0.0
          %525 = vmatprep.subr.mxu0 0.0
          %526 = vmatpush1.msra.mxu0 0.0
          %527 = vmatprep.subr.mxu0 0.0
          %528 = vmatpush1.msra.mxu0 0.0
          %529 = vmatprep.subr.mxu0 0.0
          %530 = vmatpush1.msra.mxu0 0.0
          %531 = vmatprep.subr.mxu0 0.0
          %532 = vmatpush1.msra.mxu0 0.0
          %533 = vmatprep.subr.mxu0 0.0
          %534 = vmatpush1.msra.mxu0 0.0
          %535 = vmatprep.subr.mxu0 0.0
          %536 = vmatpush1.msra.mxu0 0.0
          %537 = vmatprep.subr.mxu0 0.0
          %538 = vmatpush1.msra.mxu0 0.0
          %539 = vmatprep.subr.mxu0 0.0
          %540 = vmatpush1.msra.mxu0 0.0
          %541 = vmatprep.subr.mxu0 0.0
          %542 = vmatpush1.msra.mxu0 0.0
          %543 = vmatprep.subr.mxu0 0.0
          %544 = vmatpush1.msra.mxu0 0.0
          %545 = vmatprep.subr.mxu0 0.0
          %546 = vmatpush1.msra.mxu0 0.0
          %547 = vmatprep.subr.mxu0 0.0
          %548 = vmatpush1.msra.mxu0 0.0
          %549 = vmatprep.subr.mxu0 0.0
          %550 = vmatpush1.msra.mxu0 0.0
          %551 = vmatprep.subr.mxu0 0.0
          %552 = vmatpush1.msra.mxu0 0.0
          %553 = vmatprep.subr.mxu0 0.0
          %554 = vmatpush1.msra.mxu0 0.0
          %555 = vmatprep.mubr.f32.mxu0 0.0
          %556 = vmatmul.mubr.f32.gmra.mrb[0].mxu0 %v444
          %v557 = vpop.f32.mrb[0].mxu0
          %v558 = vadd.f32 0.0, %v557
          %v559 = vpop.f32.mrb[0].mxu0
          %560 = vmatprep.mubr.f32.mxu0 0.0
          %561 = vmatmul.mubr.f32.gmra.mrb[0].mxu0 %v447
          %v562 = vpop.f32.mrb[0].mxu0
          %v563 = vadd.f32 0.0, %v562
          %v564 = vpop.f32.mrb[0].mxu0
          %565 = vmatprep.mubr.f32.mxu0 0.0
          %566 = vmatmul.mubr.f32.gmra.mrb[0].mxu0 %v450
          %v567 = vpop.f32.mrb[0].mxu0
          %v568 = vadd.f32 0.0, %v567
          %v569 = vpop.f32.mrb[0].mxu0
          %570 = vmatprep.mubr.f32.mxu0 0.0
          %571 = vmatmul.mubr.f32.gmra.mrb[0].mxu0 %v453
          %v572 = vpop.f32.mrb[0].mxu0
          %v573 = vadd.f32 0.0, %v572
          %v574 = vpop.f32.mrb[0].mxu0
          %575 = vmatprep.mubr.f32.mxu0 0.0
          %576 = vmatmul.mubr.f32.gmra.mrb[0].mxu0 %v456
          %v577 = vpop.f32.mrb[0].mxu0
          %v578 = vadd.f32 0.0, %v577
          %v579 = vpop.f32.mrb[0].mxu0
          %580 = vmatprep.mubr.f32.mxu0 0.0
          %581 = vmatmul.mubr.f32.gmra.mrb[0].mxu0 %v459
          %v582 = vpop.f32.mrb[0].mxu0
          %v583 = vadd.f32 0.0, %v582
          %v584 = vpop.f32.mrb[0].mxu0
          %585 = vmatprep.mubr.f32.mxu0 0.0
          %586 = vmatmul.mubr.f32.gmra.mrb[0].mxu0 %v462
          %v587 = vpop.f32.mrb[0].mxu0
          %v588 = vadd.f32 0.0, %v587
          %v589 = vpop.f32.mrb[0].mxu0
          %590 = vmatprep.mubr.f32.mxu0 0.0
          %591 = vmatmul.mubr.f32.gmra.mrb[0].mxu0 %v465
          %v592 = vpop.f32.mrb[0].mxu0
          %v593 = vadd.f32 0.0, %v592
          %v594 = vpop.f32.mrb[0].mxu0
          %595 = vmatprep.mubr.f32.mxu0 0.0
          %596 = vmatmul.mubr.f32.gmra.mrb[0].mxu0 %v468
          %v597 = vpop.f32.mrb[0].mxu0
          %v598 = vadd.f32 0.0, %v597
          %v599 = vpop.f32.mrb[0].mxu0
          %600 = vmatprep.mubr.f32.mxu0 0.0
          %601 = vmatmul.mubr.f32.gmra.mrb[0].mxu0 %v471
          %v602 = vpop.f32.mrb[0].mxu0
          %v603 = vadd.f32 0.0, %v602
          %v604 = vpop.f32.mrb[0].mxu0
          %605 = vmatprep.mubr.f32.mxu0 0.0
          %606 = vmatmul.mubr.f32.gmra.mrb[0].mxu0 %v474
          %v607 = vpop.f32.mrb[0].mxu0
          %v608 = vadd.f32 0.0, %v607
          %v609 = vpop.f32.mrb[0].mxu0
          %610 = vmatprep.mubr.f32.mxu0 0.0
          %611 = vmatmul.mubr.f32.gmra.mrb[0].mxu0 %v477
          %v612 = vpop.f32.mrb[0].mxu0
          %v613 = vadd.f32 0.0, %v612
          %v614 = vpop.f32.mrb[0].mxu0
          %615 = vmatprep.mubr.f32.mxu0 0.0
          %616 = vmatmul.mubr.f32.gmra.mrb[0].mxu0 %v480
          %v617 = vpop.f32.mrb[0].mxu0
          %v618 = vadd.f32 0.0, %v617
          %v619 = vpop.f32.mrb[0].mxu0
          %620 = vmatprep.mubr.f32.mxu0 0.0
          %621 = vmatmul.mubr.f32.gmra.mrb[0].mxu0 %v483
          %v622 = vpop.f32.mrb[0].mxu0
          %v623 = vadd.f32 0.0, %v622
          %v624 = vpop.f32.mrb[0].mxu0
          %625 = vmatprep.mubr.f32.mxu0 0.0
          %626 = vmatmul.mubr.f32.gmra.mrb[0].mxu0 %v486
          %v627 = vpop.f32.mrb[0].mxu0
          %v628 = vadd.f32 0.0, %v627
          %v629 = vpop.f32.mrb[0].mxu0
          %630 = vmatprep.mubr.f32.mxu0 0.0
          %631 = vmatmul.mubr.f32.gmra.mrb[0].mxu0 %v489
          %v632 = vpop.f32.mrb[0].mxu0
          %v633 = vadd.f32 0.0, %v632
          %v634 = vpop.f32.mrb[0].mxu0
          %635 = vdwg.mxu0
          %s636 = scalar_lea.vmem %s148, 128 [#allocation5]
          %637 = vst [vmem:[%s636] sm:$0xff] %v558
          %638 = vst [vmem:[%s636 + $0x8] sm:$0xff] %v563
          %639 = vst [vmem:[%s636 + $0x10] sm:$0xff] %v568
          %640 = vst [vmem:[%s636 + $0x18] sm:$0xff] %v573
          %641 = vst [vmem:[%s636 + $0x20] sm:$0xff] %v578
          %642 = vst [vmem:[%s636 + $0x28] sm:$0xff] %v583
          %643 = vst [vmem:[%s636 + $0x30] sm:$0xff] %v588
          %644 = vst [vmem:[%s636 + $0x38] sm:$0xff] %v593
          %645 = vst [vmem:[%s636 + $0x40] sm:$0xff] %v598
          %646 = vst [vmem:[%s636 + $0x48] sm:$0xff] %v603
          %647 = vst [vmem:[%s636 + $0x50] sm:$0xff] %v608
          %648 = vst [vmem:[%s636 + $0x58] sm:$0xff] %v613
          %649 = vst [vmem:[%s636 + $0x60] sm:$0xff] %v618
          %650 = vst [vmem:[%s636 + $0x68] sm:$0xff] %v623
          %651 = vst [vmem:[%s636 + $0x70] sm:$0xff] %v628
          %652 = vst [vmem:[%s636 + $0x78] sm:$0xff] %v633
        $region36: #{tpu_custom_call.1} parent=23 // pred_fallthru
          _
        %s653 = sadd.s32 %s150, 2
        %p654 = scmp.lt.s32.totalorder %s653, 3
        // Predicated region
        $region37: #{tpu_custom_call.1} parent=23 // pred_check
          %p655 = pneg %p654
        $region38: #{tpu_custom_call.1} parent=23 // pred_check_branch
          %657 = sbr.rel (%p655) target = $region40
        $region39: #{tpu_custom_call.1} parent=23 // pred_region
          %s658 = smul.u32 %s653, 4
          %s659 = scalar_lea.vmem %s130, %s658 [#allocation2]
          %v660 = vld [vmem:[%s659] sm:$0xff]
          %v661 = vmul.f32 %v660, 0.125
          %662 = vxpose.xlu0.b32.start [1/16] %v661, 128
          %663 = vxpose.xlu0.b32.cont [2/16] 0.0, 128
          %664 = vxpose.xlu0.b32.cont [3/16] 0.0, 128
          %665 = vxpose.xlu0.b32.cont [4/16] 0.0, 128
          %666 = vxpose.xlu0.b32.cont [5/16] 0.0, 128
          %667 = vxpose.xlu0.b32.cont [6/16] 0.0, 128
          %668 = vxpose.xlu0.b32.cont [7/16] 0.0, 128
          %669 = vxpose.xlu0.b32.cont [8/16] 0.0, 128
          %670 = vxpose.xlu0.b32.cont [9/16] 0.0, 128
          %671 = vxpose.xlu0.b32.cont [10/16] 0.0, 128
          %672 = vxpose.xlu0.b32.cont [11/16] 0.0, 128
          %673 = vxpose.xlu0.b32.cont [12/16] 0.0, 128
          %674 = vxpose.xlu0.b32.cont [13/16] 0.0, 128
          %675 = vxpose.xlu0.b32.cont [14/16] 0.0, 128
          %676 = vxpose.xlu0.b32.cont [15/16] 0.0, 128
          %677 = vxpose.xlu0.b32.end [16/16] 0.0, 128
          %v678 = vpop.trf.xlu0
          %v679 = vpop.trf.xlu0
          %v680 = vpop.trf.xlu0
          %v681 = vpop.trf.xlu0
          %v682 = vpop.trf.xlu0
          %v683 = vpop.trf.xlu0
          %v684 = vpop.trf.xlu0
          %v685 = vpop.trf.xlu0
          %v686 = vpop.trf.xlu0
          %v687 = vpop.trf.xlu0
          %v688 = vpop.trf.xlu0
          %v689 = vpop.trf.xlu0
          %v690 = vpop.trf.xlu0
          %v691 = vpop.trf.xlu0
          %v692 = vpop.trf.xlu0
          %v693 = vpop.trf.xlu0
          %vm694 = vcmask 64512
          %v696 = vsel %vm694, %v678, 0
          %v699 = vsel %vm694, %v679, 0
          %v702 = vsel %vm694, %v680, 0
          %v705 = vsel %vm694, %v681, 0
          %v708 = vsel %vm694, %v682, 0
          %v711 = vsel %vm694, %v683, 0
          %v714 = vsel %vm694, %v684, 0
          %v717 = vsel %vm694, %v685, 0
          %v720 = vsel %vm694, %v686, 0
          %v723 = vsel %vm694, %v687, 0
          %v726 = vsel %vm694, %v688, 0
          %v729 = vsel %vm694, %v689, 0
          %v732 = vsel %vm694, %v690, 0
          %v735 = vsel %vm694, %v691, 0
          %v738 = vsel %vm694, %v692, 0
          %v741 = vsel %vm694, %v693, 0
          %743 = vmatprep.subr.mxu0 0.0
          %744 = vmatpush1.msra.mxu0 %v660
          %745 = vmatprep.subr.mxu0 0.0
          %746 = vmatpush1.msra.mxu0 0.0
          %747 = vmatprep.subr.mxu0 0.0
          %748 = vmatpush1.msra.mxu0 0.0
          %749 = vmatprep.subr.mxu0 0.0
          %750 = vmatpush1.msra.mxu0 0.0
          %751 = vmatprep.subr.mxu0 0.0
          %752 = vmatpush1.msra.mxu0 0.0
          %753 = vmatprep.subr.mxu0 0.0
          %754 = vmatpush1.msra.mxu0 0.0
          %755 = vmatprep.subr.mxu0 0.0
          %756 = vmatpush1.msra.mxu0 0.0
          %757 = vmatprep.subr.mxu0 0.0
          %758 = vmatpush1.msra.mxu0 0.0
          %759 = vmatprep.subr.mxu0 0.0
          %760 = vmatpush1.msra.mxu0 0.0
          %761 = vmatprep.subr.mxu0 0.0
          %762 = vmatpush1.msra.mxu0 0.0
          %763 = vmatprep.subr.mxu0 0.0
          %764 = vmatpush1.msra.mxu0 0.0
          %765 = vmatprep.subr.mxu0 0.0
          %766 = vmatpush1.msra.mxu0 0.0
          %767 = vmatprep.subr.mxu0 0.0
          %768 = vmatpush1.msra.mxu0 0.0
          %769 = vmatprep.subr.mxu0 0.0
          %770 = vmatpush1.msra.mxu0 0.0
          %771 = vmatprep.subr.mxu0 0.0
          %772 = vmatpush1.msra.mxu0 0.0
          %773 = vmatprep.subr.mxu0 0.0
          %774 = vmatpush1.msra.mxu0 0.0
          %775 = vmatprep.subr.mxu0 0.0
          %776 = vmatpush1.msra.mxu0 0.0
          %777 = vmatprep.subr.mxu0 0.0
          %778 = vmatpush1.msra.mxu0 0.0
          %779 = vmatprep.subr.mxu0 0.0
          %780 = vmatpush1.msra.mxu0 0.0
          %781 = vmatprep.subr.mxu0 0.0
          %782 = vmatpush1.msra.mxu0 0.0
          %783 = vmatprep.subr.mxu0 0.0
          %784 = vmatpush1.msra.mxu0 0.0
          %785 = vmatprep.subr.mxu0 0.0
          %786 = vmatpush1.msra.mxu0 0.0
          %787 = vmatprep.subr.mxu0 0.0
          %788 = vmatpush1.msra.mxu0 0.0
          %789 = vmatprep.subr.mxu0 0.0
          %790 = vmatpush1.msra.mxu0 0.0
          %791 = vmatprep.subr.mxu0 0.0
          %792 = vmatpush1.msra.mxu0 0.0
          %793 = vmatprep.subr.mxu0 0.0
          %794 = vmatpush1.msra.mxu0 0.0
          %795 = vmatprep.subr.mxu0 0.0
          %796 = vmatpush1.msra.mxu0 0.0
          %797 = vmatprep.subr.mxu0 0.0
          %798 = vmatpush1.msra.mxu0 0.0
          %799 = vmatprep.subr.mxu0 0.0
          %800 = vmatpush1.msra.mxu0 0.0
          %801 = vmatprep.subr.mxu0 0.0
          %802 = vmatpush1.msra.mxu0 0.0
          %803 = vmatprep.subr.mxu0 0.0
          %804 = vmatpush1.msra.mxu0 0.0
          %805 = vmatprep.subr.mxu0 0.0
          %806 = vmatpush1.msra.mxu0 0.0
          %807 = vmatprep.mubr.f32.mxu0 0.0
          %808 = vmatmul.mubr.f32.gmra.mrb[0].mxu0 %v696
          %v809 = vpop.f32.mrb[0].mxu0
          %v810 = vadd.f32 0.0, %v809
          %v811 = vpop.f32.mrb[0].mxu0
          %812 = vmatprep.mubr.f32.mxu0 0.0
          %813 = vmatmul.mubr.f32.gmra.mrb[0].mxu0 %v699
          %v814 = vpop.f32.mrb[0].mxu0
          %v815 = vadd.f32 0.0, %v814
          %v816 = vpop.f32.mrb[0].mxu0
          %817 = vmatprep.mubr.f32.mxu0 0.0
          %818 = vmatmul.mubr.f32.gmra.mrb[0].mxu0 %v702
          %v819 = vpop.f32.mrb[0].mxu0
          %v820 = vadd.f32 0.0, %v819
          %v821 = vpop.f32.mrb[0].mxu0
          %822 = vmatprep.mubr.f32.mxu0 0.0
          %823 = vmatmul.mubr.f32.gmra.mrb[0].mxu0 %v705
          %v824 = vpop.f32.mrb[0].mxu0
          %v825 = vadd.f32 0.0, %v824
          %v826 = vpop.f32.mrb[0].mxu0
          %827 = vmatprep.mubr.f32.mxu0 0.0
          %828 = vmatmul.mubr.f32.gmra.mrb[0].mxu0 %v708
          %v829 = vpop.f32.mrb[0].mxu0
          %v830 = vadd.f32 0.0, %v829
          %v831 = vpop.f32.mrb[0].mxu0
          %832 = vmatprep.mubr.f32.mxu0 0.0
          %833 = vmatmul.mubr.f32.gmra.mrb[0].mxu0 %v711
          %v834 = vpop.f32.mrb[0].mxu0
          %v835 = vadd.f32 0.0, %v834
          %v836 = vpop.f32.mrb[0].mxu0
          %837 = vmatprep.mubr.f32.mxu0 0.0
          %838 = vmatmul.mubr.f32.gmra.mrb[0].mxu0 %v714
          %v839 = vpop.f32.mrb[0].mxu0
          %v840 = vadd.f32 0.0, %v839
          %v841 = vpop.f32.mrb[0].mxu0
          %842 = vmatprep.mubr.f32.mxu0 0.0
          %843 = vmatmul.mubr.f32.gmra.mrb[0].mxu0 %v717
          %v844 = vpop.f32.mrb[0].mxu0
          %v845 = vadd.f32 0.0, %v844
          %v846 = vpop.f32.mrb[0].mxu0
          %847 = vmatprep.mubr.f32.mxu0 0.0
          %848 = vmatmul.mubr.f32.gmra.mrb[0].mxu0 %v720
          %v849 = vpop.f32.mrb[0].mxu0
          %v850 = vadd.f32 0.0, %v849
          %v851 = vpop.f32.mrb[0].mxu0
          %852 = vmatprep.mubr.f32.mxu0 0.0
          %853 = vmatmul.mubr.f32.gmra.mrb[0].mxu0 %v723
          %v854 = vpop.f32.mrb[0].mxu0
          %v855 = vadd.f32 0.0, %v854
          %v856 = vpop.f32.mrb[0].mxu0
          %857 = vmatprep.mubr.f32.mxu0 0.0
          %858 = vmatmul.mubr.f32.gmra.mrb[0].mxu0 %v726
          %v859 = vpop.f32.mrb[0].mxu0
          %v860 = vadd.f32 0.0, %v859
          %v861 = vpop.f32.mrb[0].mxu0
          %862 = vmatprep.mubr.f32.mxu0 0.0
          %863 = vmatmul.mubr.f32.gmra.mrb[0].mxu0 %v729
          %v864 = vpop.f32.mrb[0].mxu0
          %v865 = vadd.f32 0.0, %v864
          %v866 = vpop.f32.mrb[0].mxu0
          %867 = vmatprep.mubr.f32.mxu0 0.0
          %868 = vmatmul.mubr.f32.gmra.mrb[0].mxu0 %v732
          %v869 = vpop.f32.mrb[0].mxu0
          %v870 = vadd.f32 0.0, %v869
          %v871 = vpop.f32.mrb[0].mxu0
          %872 = vmatprep.mubr.f32.mxu0 0.0
          %873 = vmatmul.mubr.f32.gmra.mrb[0].mxu0 %v735
          %v874 = vpop.f32.mrb[0].mxu0
          %v875 = vadd.f32 0.0, %v874
          %v876 = vpop.f32.mrb[0].mxu0
          %877 = vmatprep.mubr.f32.mxu0 0.0
          %878 = vmatmul.mubr.f32.gmra.mrb[0].mxu0 %v738
          %v879 = vpop.f32.mrb[0].mxu0
          %v880 = vadd.f32 0.0, %v879
          %v881 = vpop.f32.mrb[0].mxu0
          %882 = vmatprep.mubr.f32.mxu0 0.0
          %883 = vmatmul.mubr.f32.gmra.mrb[0].mxu0 %v741
          %v884 = vpop.f32.mrb[0].mxu0
          %v885 = vadd.f32 0.0, %v884
          %v886 = vpop.f32.mrb[0].mxu0
          %887 = vdwg.mxu0
          %s888 = scalar_lea.vmem %s148, 256 [#allocation5]
          %889 = vst [vmem:[%s888] sm:$0xff] %v810
          %890 = vst [vmem:[%s888 + $0x8] sm:$0xff] %v815
          %891 = vst [vmem:[%s888 + $0x10] sm:$0xff] %v820
          %892 = vst [vmem:[%s888 + $0x18] sm:$0xff] %v825
          %893 = vst [vmem:[%s888 + $0x20] sm:$0xff] %v830
          %894 = vst [vmem:[%s888 + $0x28] sm:$0xff] %v835
          %895 = vst [vmem:[%s888 + $0x30] sm:$0xff] %v840
          %896 = vst [vmem:[%s888 + $0x38] sm:$0xff] %v845
          %897 = vst [vmem:[%s888 + $0x40] sm:$0xff] %v850
          %898 = vst [vmem:[%s888 + $0x48] sm:$0xff] %v855
          %899 = vst [vmem:[%s888 + $0x50] sm:$0xff] %v860
          %900 = vst [vmem:[%s888 + $0x58] sm:$0xff] %v865
          %901 = vst [vmem:[%s888 + $0x60] sm:$0xff] %v870
          %902 = vst [vmem:[%s888 + $0x68] sm:$0xff] %v875
          %903 = vst [vmem:[%s888 + $0x70] sm:$0xff] %v880
          %904 = vst [vmem:[%s888 + $0x78] sm:$0xff] %v885
        $region40: #{tpu_custom_call.1} parent=23 // pred_fallthru
          _
        %s905 = sand.u32 %s66, 1
        %s906 = scalar_lea.sflag [#allocation4], %s905
        %s907 = sand.u32 %s66, 1
        %s908 = smul.addr %s907, 384
        %s909 = scalar_lea.vmem [#allocation5], %s908
        // Predicated region
        $region41: #{tpu_custom_call.1} parent=23 // pred_check
          %p910 = pneg %p76
        $region42: #{tpu_custom_call.1} parent=23 // pred_check_branch
          %912 = sbr.rel (%p910) target = $region44
        $region43: #{tpu_custom_call.1} parent=23 // pred_region
          %s913 = smul.u32 3, %s23
          %s915 = ssub.s32 6144, 6144
          %916 = vsyncadd %s906, %s915
          %s917 = smul.addr %s913, 16
          %s918 = smul.addr %s22, 48
          %s919 = sadd.s32 %s917, %s918
          %s920 = smul.addr %s919, 128
          %s921 = scalar_lea.hbm %s1, %s920
          %s922 = sshll.u32 %s909, 4
          %s923 = int_to_ptr.vmem [resolvable:$true] %s922
          %928 = dma.vmem_to_hbm [thread:$0]  %s923, 6144, %s921, %s906, 128, 128, 8
        $region44: #{tpu_custom_call.1} parent=23 // pred_fallthru
          _
      $region24: #{tpu_custom_call.1} parent=5 // pred_fallthru
        _
      %p929 = scmp.le.s32.totalorder 2, %s13
      // Predicated region
      $region45: #{tpu_custom_call.1} parent=5 // pred_check
        %p930 = pneg %p929
      $region46: #{tpu_custom_call.1} parent=5 // pred_check_branch
        %932 = sbr.rel (%p930) target = $region48
      $region47: #{tpu_custom_call.1} parent=5 // pred_region
        %s933 = ssub.s32 %s13, 2
        // Predicated region
        $region49: #{tpu_custom_call.1} parent=47 // pred_check
          %p934 = pneg %p82
        $region50: #{tpu_custom_call.1} parent=47 // pred_check_branch
          %936 = sbr.rel (%p934) target = $region52
        $region51: #{tpu_custom_call.1} parent=47 // pred_region
          %s937 = sand.u32 %s67, 1
          %s938 = scalar_lea.sflag [#allocation4], %s937
          %s939 = sand.u32 %s67, 1
          %s940 = smul.addr %s939, 384
          %s941 = scalar_lea.vmem [#allocation5], %s940
          %942 = dma.done %s938, 6144
        $region52: #{tpu_custom_call.1} parent=47 // pred_fallthru
          _
      $region48: #{tpu_custom_call.1} parent=5 // pred_fallthru
        _
    $region6: #{tpu_custom_call.1} parent=1 // loop_footer
      %s17 = sadd.s32 1, %s13
    $region7: #{tpu_custom_call.1} parent=1 // loop_footer_branch
      %12 = sbr.rel target = $region3
    $region8: #{tpu_custom_call.1} parent=1 // loop_exit
      _
    %943 = vsyncpa [#allocation3], 1
    %s944 = scalar_lea.sflag [#allocation3], 1
    %945 = vsyncpa %s944, 1
    %946 = vsyncpa [#allocation4], 1
    %s947 = scalar_lea.sflag [#allocation4], 1
    %948 = vsyncpa %s947, 1

</llo_original>
